<compile_context>
chip_gen: v5e
topology: v5e:2x2
jax: 0.10.0
libtpu: 0.0.40
codegen_flags: <defaults>
</compile_context>

<pallas_src>
import functools
import math

import jax
import jax.numpy as jnp
from jax.experimental import pallas as pl
from jax.experimental.pallas import tpu as pltpu

_VMEM_LIMIT = 32 * 1024 * 1024   # explicit scoped-VMEM cap (safe on v5e/v6e/v7x)


def _round_up(a, b):
    return (a + b - 1) // b * b


# ----------------------------------------------------------------------------
# Kernel 1: node-level projections (grid over node tiles, "parallel")
# ----------------------------------------------------------------------------
def _node_kernel(x_ref, pos_ref, w_in_ref, b_in_ref, w_node_ref, w_p1_ref,
                 dst_ref, src_ref, *, out_ch):
    f32 = jnp.float32
    C = out_ch
    # lin_in + ReLU
    h = jnp.maximum(
        jnp.dot(x_ref[...], w_in_ref[...], preferred_element_type=f32)
        + b_in_ref[...], 0.0)
    # fused bias-free projections [w_dst | w_src | w_lin] -> one MXU push
    proj = jnp.dot(h, w_node_ref[...], preferred_element_type=f32)           # [TN, 3C]
    # pos_nn layer 1 hoisted to node level: Lin(3,64) is linear, so
    # (pos_i - pos_j) @ W1 == pW_i - pW_j  (removes the K=3 per-edge matmul).
    pW = jnp.dot(pos_ref[...], w_p1_ref[...], preferred_element_type=f32)    # [TN, 64]
    dst_ref[...] = jnp.concatenate([pW, proj[:, :C]], axis=1)                # [TN, 64+C]
    src_ref[...] = jnp.concatenate([pW, proj[:, C:]], axis=1)                # [TN, 64+2C]


# ----------------------------------------------------------------------------
# Kernel 2: edge-tiled PointTransformerConv + lin_out (grid over edge tiles)
# ----------------------------------------------------------------------------
def _edge_kernel(dst_g_ref, src_g_ref, dt_ref,
                 b_p1_ref, w_p2_ref, b_p2_ref,
                 w_a1_ref, b_a1_ref, w_a2_ref, b_a2_ref,
                 w_out_ref, b_out_ref,
                 o_ref, acc_ref, m_ref, *, out_ch):
    f32 = jnp.float32
    C = out_ch
    H = dst_g_ref.shape[-1] - C          # pos_nn / attn_nn hidden width (64)
    e = pl.program_id(0)

    @pl.when(e == 0)
    def _():
        acc_ref[...] = jnp.zeros_like(acc_ref)
        m_ref[...] = jnp.full_like(m_ref, -jnp.inf)

    dst_g = dst_g_ref[...]               # [TE, H+C ] = [pW_i | a_dst_i]
    src_g = src_g_ref[...]               # [TE, H+2C] = [pW_j | a_src_j | x_lin_j]
    pW_i, a_i = dst_g[:, :H], dst_g[:, H:]
    pW_j, a_j, x_j = src_g[:, :H], src_g[:, H:H + C], src_g[:, H + C:]

    # pos_nn (layer 1 hoisted): delta = relu(relu(pW_i - pW_j + b1) @ W2 + b2)
    p = jnp.maximum(pW_i - pW_j + b_p1_ref[...], 0.0)
    delta = jnp.maximum(
        jnp.dot(p, w_p2_ref[...], preferred_element_type=f32) + b_p2_ref[...], 0.0)

    # attn_nn(a_dst_i - a_src_j + delta)
    a = a_i - a_j + delta
    a = jnp.maximum(
        jnp.dot(a, w_a1_ref[...], preferred_element_type=f32) + b_a1_ref[...], 0.0)
    s = jnp.maximum(
        jnp.dot(a, w_a2_ref[...], preferred_element_type=f32) + b_a2_ref[...], 0.0)

    # Online segment softmax with a running GLOBAL per-channel max: the shift is
    # identical for all destinations, so after the final division the result is
    # mathematically identical to per-destination softmax.
    # TODO(synk): switch to a per-destination max (or denominator sanity check)
    #             if score ranges can exceed ~80 in f32 (silent underflow risk).
    m_old = m_ref[...]
    m_new = jnp.maximum(m_old, jnp.max(s, axis=0, keepdims=True))   # [1, C]
    rescale = jnp.exp(m_old - m_new)                                # [1, C]
    ex = jnp.exp(s - m_new)                                         # [TE, C]
    msg = ex * (x_j + delta)                                        # [TE, C]

    # Fused numerator|denominator scatter-add: D^T arrives pre-transposed, so
    # this is a plain [N,TE]@[TE,2C] MXU matmul (bf16 operands, f32 accumulate).
    packed = jnp.concatenate([msg, ex], axis=1).astype(jnp.bfloat16)    # [TE, 2C]
    upd = jnp.dot(dt_ref[...], packed, preferred_element_type=f32)      # [N, 2C]
    acc_ref[...] = acc_ref[...] * jnp.concatenate([rescale, rescale], axis=1) + upd
    m_ref[...] = m_new

    @pl.when(e == pl.num_programs(0) - 1)
    def _():
        acc = acc_ref[...]
        conv = acc[:, :C] * pl.reciprocal(acc[:, C:] + 1e-16, approx=True)   # [N, C]
        # lin_out + ReLU; output lanes padded to a 128 multiple (unmasked vst),
        # wrapper slices back to out_ch.
        o_ref[...] = jnp.maximum(
            jnp.dot(conv, w_out_ref[...], preferred_element_type=f32)
            + b_out_ref[...], 0.0)


# ----------------------------------------------------------------------------
# Wrapper
# ----------------------------------------------------------------------------
def transformer_block_forward(x, pos, edge_index, params, *,
                              edge_tile=256, node_tile=32):
    """TransformerBlock forward = node-projection kernel + edge-tiled conv kernel.

    edge_tile is the contraction width of the scatter matmul: 256 keeps the
    256-wide MXU of v6e/v7x full; 128 suffices on v5e.
    """
    f32 = jnp.float32
    N, in_ch = x.shape
    C = params["w_lin"].shape[1]
    H = params["w_p1"].shape[1]

    # -- fused / lane-padded weights ------------------------------------------
    w_node = jnp.concatenate(
        [params["w_dst"], params["w_src"], params["w_lin"]], axis=1)      # [in, 3C]
    out_pad = _round_up(max(C, 128), 128)
    w_out_p = jnp.zeros((C, out_pad), f32).at[:, :C].set(params["w_out"])
    b_out_p = jnp.zeros((1, out_pad), f32).at[:, :C].set(params["b_out"])

    # -- kernel 1: node-level features ----------------------------------------
    n_pad = _round_up(N, node_tile)
    x_p = jnp.zeros((n_pad, in_ch), f32).at[:N].set(x)
    pos_p = jnp.zeros((n_pad, 3), f32).at[:N].set(pos)

    dst_feat, src_feat = pl.pallas_call(
        functools.partial(_node_kernel, out_ch=C),
        out_shape=(jax.ShapeDtypeStruct((n_pad, H + C), f32),
                   jax.ShapeDtypeStruct((n_pad, H + 2 * C), f32)),
        grid_spec=pltpu.PrefetchScalarGridSpec(
            num_scalar_prefetch=0,
            grid=(n_pad // node_tile,),
            in_specs=[
                pl.BlockSpec((node_tile, in_ch), lambda i: (i, 0)),
                pl.BlockSpec((node_tile, 3), lambda i: (i, 0)),
                pl.BlockSpec((in_ch, in_ch), lambda i: (0, 0)),
                pl.BlockSpec((1, in_ch), lambda i: (0, 0)),
                pl.BlockSpec((in_ch, 3 * C), lambda i: (0, 0)),
                pl.BlockSpec((3, H), lambda i: (0, 0)),
            ],
            out_specs=[
                pl.BlockSpec((node_tile, H + C), lambda i: (i, 0)),
                pl.BlockSpec((node_tile, H + 2 * C), lambda i: (i, 0)),
            ]),
        compiler_params=pltpu.CompilerParams(
            dimension_semantics=("parallel",),       # node tiles independent
            vmem_limit_bytes=_VMEM_LIMIT),
    )(x_p, pos_p, params["w_in"], params["b_in"], w_node, params["w_p1"])

    # -- edges: add self loops (PyG add_self_loops=True), pad to tile multiple --
    # (assumes edge_index carries no pre-existing self loops, matching PyG's
    #  remove-then-re-add behaviour)
    ids = jnp.arange(N, dtype=jnp.int32)
    src = jnp.concatenate([edge_index[0].astype(jnp.int32), ids])
    dst = jnp.concatenate([edge_index[1].astype(jnp.int32), ids])
    E = int(src.shape[0])
    e_pad = _round_up(E, edge_tile)
    pad = e_pad - E
    zpad = jnp.zeros((pad,), jnp.int32)
    src_gather = jnp.concatenate([src, zpad])
    dst_gather = jnp.concatenate([dst, zpad])
    # padded edges scatter to row index N -> all-zero one-hot column (no effect)
    dst_scatter = jnp.concatenate([dst, jnp.full((pad,), N, jnp.int32)])

    # O(E) per-edge index gathers (replaces the old O(E*N) one-hot gather matmuls).
    # TODO(synk): for very large graphs move this gather inside the edge kernel
    #             via scalar-prefetched indices + per-row make_async_copy.
    src_g = jnp.take(src_feat, src_gather, axis=0)       # [E_pad, H+2C]
    dst_g = jnp.take(dst_feat, dst_gather, axis=0)       # [E_pad, H+C]

    # Destination one-hot shipped already transposed ([N, E_pad] bf16) so the
    # in-kernel scatter is a plain untransposed matmul.
    dt = (dst_scatter[None, :] == jnp.arange(N, dtype=jnp.int32)[:, None]
          ).astype(jnp.bfloat16)

    out_p = pl.pallas_call(
        functools.partial(_edge_kernel, out_ch=C),
        out_shape=jax.ShapeDtypeStruct((N, out_pad), f32),
        grid_spec=pltpu.PrefetchScalarGridSpec(
            num_scalar_prefetch=0,
            grid=(e_pad // edge_tile,),
            in_specs=[
                pl.BlockSpec((edge_tile, H + C), lambda e: (e, 0)),
                pl.BlockSpec((edge_tile, H + 2 * C), lambda e: (e, 0)),
                pl.BlockSpec((N, edge_tile), lambda e: (0, e)),
                pl.BlockSpec((1, H), lambda e: (0, 0)),         # b_p1
                pl.BlockSpec((H, C), lambda e: (0, 0)),         # w_p2
                pl.BlockSpec((1, C), lambda e: (0, 0)),         # b_p2
                pl.BlockSpec((C, H), lambda e: (0, 0)),         # w_a1
                pl.BlockSpec((1, H), lambda e: (0, 0)),         # b_a1
                pl.BlockSpec((H, C), lambda e: (0, 0)),         # w_a2
                pl.BlockSpec((1, C), lambda e: (0, 0)),         # b_a2
                pl.BlockSpec((C, out_pad), lambda e: (0, 0)),   # w_out (padded)
                pl.BlockSpec((1, out_pad), lambda e: (0, 0)),   # b_out (padded)
            ],
            out_specs=pl.BlockSpec((N, out_pad), lambda e: (0, 0)),
            scratch_shapes=[
                pltpu.VMEM((N, 2 * C), f32),   # fused numerator|denominator acc
                pltpu.VMEM((1, C), f32),       # running per-channel max
            ]),
        compiler_params=pltpu.CompilerParams(
            dimension_semantics=("arbitrary",),   # edge axis carries acc/max
            vmem_limit_bytes=_VMEM_LIMIT),
    )(dst_g, src_g, dt, params["b_p1"], params["w_p2"], params["b_p2"],
      params["w_a1"], params["b_a1"], params["w_a2"], params["b_a2"],
      w_out_p, b_out_p)

    return out_p[:, :C]


# ----------------------------------------------------------------------------
# Deterministic parameters matching TransformerBlock's submodule shapes
# ----------------------------------------------------------------------------
def make_params(key, in_ch, out_ch, hidden=64):
    ks = jax.random.split(key, 14)
    f32 = jnp.float32

    def lin(k, i, o):
        return jax.random.normal(k, (i, o), f32) * (1.0 / math.sqrt(i))

    return dict(
        # lin_in: Linear(in_ch, in_ch)
        w_in=lin(ks[0], in_ch, in_ch),
        b_in=jax.random.normal(ks[1], (1, in_ch), f32) * 0.01,
        # PointTransformerConv lin / lin_src / lin_dst (bias=False)
        w_lin=lin(ks[2], in_ch, out_ch),
        w_src=lin(ks[3], in_ch, out_ch),
        w_dst=lin(ks[4], in_ch, out_ch),
        # pos_nn = MLP([3, 64, out_ch], batch_norm=False)
        w_p1=lin(ks[5], 3, hidden),
        b_p1=jax.random.normal(ks[6], (1, hidden), f32) * 0.01,
        w_p2=lin(ks[7], hidden, out_ch),
        b_p2=jax.random.normal(ks[8], (1, out_ch), f32) * 0.01,
        # attn_nn = MLP([out_ch, 64, out_ch], batch_norm=False)
        w_a1=lin(ks[9], out_ch, hidden),
        b_a1=jax.random.normal(ks[10], (1, hidden), f32) * 0.01,
        w_a2=lin(ks[11], hidden, out_ch),
        b_a2=jax.random.normal(ks[12], (1, out_ch), f32) * 0.01,
        # lin_out: Linear(out_ch, out_ch)
        w_out=lin(ks[13], out_ch, out_ch),
        b_out=jnp.zeros((1, out_ch), f32),
    )


# ----------------------------------------------------------------------------
# Pure-JAX (XLA) reference for correctness checking
# ----------------------------------------------------------------------------
def _reference(x, pos, edge_index, params):
    relu = jax.nn.relu
    N = x.shape[0]
    C = params["w_lin"].shape[1]
    h = relu(x @ params["w_in"] + params["b_in"])
    x_lin = h @ params["w_lin"]
    a_src = h @ params["w_src"]
    a_dst = h @ params["w_dst"]
    ids = jnp.arange(N)
    src = jnp.concatenate([edge_index[0], ids])
    dst = jnp.concatenate([edge_index[1], ids])
    p = relu((pos[dst] - pos[src]) @ params["w_p1"] + params["b_p1"])
    delta = relu(p @ params["w_p2"] + params["b_p2"])
    a = a_dst[dst] - a_src[src] + delta
    a = relu(a @ params["w_a1"] + params["b_a1"])
    a = relu(a @ params["w_a2"] + params["b_a2"])
    seg_max = jnp.full((N, C), -jnp.inf).at[dst].max(a)
    ex = jnp.exp(a - seg_max[dst])
    den = jnp.zeros((N, C)).at[dst].add(ex)
    num = jnp.zeros((N, C)).at[dst].add(ex * (x_lin[src] + delta))
    conv = num / den
    return relu(conv @ params["w_out"] + params["b_out"])


if __name__ == "__main__":
    key = jax.random.PRNGKey(0)
    kx, kp, kw = jax.random.split(key, 3)

    # Small synthetic point cloud / graph: 64 nodes, ring with +-1/+-2 neighbours
    # (every node gets incoming edges; self-loops are added by the wrapper).
    N = 64
    in_ch, out_ch = 8, 32
    ids = jnp.arange(N)
    src = jnp.concatenate([(ids + 1) % N, (ids - 1) % N, (ids + 2) % N, (ids - 2) % N])
    dst = jnp.concatenate([ids, ids, ids, ids])
    edge_index = jnp.stack([src, dst], axis=0).astype(jnp.int32)   # [2, 256]

    x = jax.random.normal(kx, (N, in_ch), jnp.float32)             # node features
    pos = jax.random.normal(kp, (N, 3), jnp.float32)               # node positions
    params = make_params(kw, in_ch, out_ch)

    out = transformer_block_forward(x, pos, edge_index, params)
    out = jax.block_until_ready(out)

    ref = jax.block_until_ready(_reference(x, pos, edge_index, params))

    assert out.shape == (N, out_ch)
    assert bool(jnp.all(jnp.isfinite(out)))
    assert bool(jnp.all(out >= 0.0))          # final ReLU
    rel_err = float(jnp.max(jnp.abs(out - ref)) / (jnp.max(jnp.abs(ref)) + 1e-6))
    assert rel_err < 5e-2, f"relative max error too large: {rel_err}"
    print("KERNEL_OK")
</pallas_src>

<mosaic_0001>
module attributes {stable_mosaic.version = 11 : i64} {
  func.func @_node_kernel(%arg0: i32, %arg1: memref<32x8xf32, #tpu.memory_space<vmem>>, %arg2: memref<32x3xf32, #tpu.memory_space<vmem>>, %arg3: memref<8x8xf32, #tpu.memory_space<vmem>>, %arg4: memref<1x8xf32, #tpu.memory_space<vmem>>, %arg5: memref<8x96xf32, #tpu.memory_space<vmem>>, %arg6: memref<3x64xf32, #tpu.memory_space<vmem>>, %arg7: memref<32x96xf32, #tpu.memory_space<vmem>>, %arg8: memref<32x128xf32, #tpu.memory_space<vmem>>) attributes {dimension_semantics = [#tpu.dimension_semantics<parallel>], iteration_bounds = array<i64: 2>, scalar_prefetch = 0 : i64, scratch_operands = 0 : i64, tpu.core_type = #tpu.core_type<tc>, window_params = [{transform_indices = @transform_0, window_bounds = array<i64: 32, 8>}, {transform_indices = @transform_1, window_bounds = array<i64: 32, 3>}, {pipeline_mode = #tpu.pipeline_mode<synchronous>, transform_indices = @transform_2, window_bounds = array<i64: 8, 8>}, {pipeline_mode = #tpu.pipeline_mode<synchronous>, transform_indices = @transform_3, window_bounds = array<i64: 1, 8>}, {pipeline_mode = #tpu.pipeline_mode<synchronous>, transform_indices = @transform_4, window_bounds = array<i64: 8, 96>}, {pipeline_mode = #tpu.pipeline_mode<synchronous>, transform_indices = @transform_5, window_bounds = array<i64: 3, 64>}, {transform_indices = @transform_6, window_bounds = array<i64: 32, 96>}, {transform_indices = @transform_7, window_bounds = array<i64: 32, 128>}]} {
    %c0 = arith.constant 0 : index
    %c0_0 = arith.constant 0 : index
    %0 = vector.load %arg1[%c0, %c0_0] : memref<32x8xf32, #tpu.memory_space<vmem>>, vector<32x8xf32>
    %c0_1 = arith.constant 0 : index
    %c0_2 = arith.constant 0 : index
    %1 = vector.load %arg3[%c0_1, %c0_2] : memref<8x8xf32, #tpu.memory_space<vmem>>, vector<8x8xf32>
    %cst = arith.constant dense<0.000000e+00> : vector<32x8xf32>
    %2 = tpu.matmul %0, %1, %cst {dimension_numbers = #tpu.dot_dimension_numbers<[1], [0], [0], [1], [0, 0, 1, 1], [], []>} : vector<32x8xf32>, vector<8x8xf32>, vector<32x8xf32> -> vector<32x8xf32>
    %c0_3 = arith.constant 0 : index
    %c0_4 = arith.constant 0 : index
    %3 = vector.load %arg4[%c0_3, %c0_4] : memref<1x8xf32, #tpu.memory_space<vmem>>, vector<1x8xf32>
    %4 = vector.broadcast %3 : vector<1x8xf32> to vector<32x8xf32>
    %5 = arith.addf %2, %4 : vector<32x8xf32>
    %cst_5 = arith.constant 0.000000e+00 : f32
    %6 = vector.broadcast %cst_5 : f32 to vector<32x8xf32>
    %7 = arith.maximumf %5, %6 : vector<32x8xf32>
    %c0_6 = arith.constant 0 : index
    %c0_7 = arith.constant 0 : index
    %8 = vector.load %arg5[%c0_6, %c0_7] : memref<8x96xf32, #tpu.memory_space<vmem>>, vector<8x96xf32>
    %cst_8 = arith.constant dense<0.000000e+00> : vector<32x96xf32>
    %9 = tpu.matmul %7, %8, %cst_8 {dimension_numbers = #tpu.dot_dimension_numbers<[1], [0], [0], [1], [0, 0, 1, 1], [], []>} : vector<32x8xf32>, vector<8x96xf32>, vector<32x96xf32> -> vector<32x96xf32>
    %c0_9 = arith.constant 0 : index
    %c0_10 = arith.constant 0 : index
    %10 = vector.load %arg2[%c0_9, %c0_10] : memref<32x3xf32, #tpu.memory_space<vmem>>, vector<32x3xf32>
    %c0_11 = arith.constant 0 : index
    %c0_12 = arith.constant 0 : index
    %11 = vector.load %arg6[%c0_11, %c0_12] : memref<3x64xf32, #tpu.memory_space<vmem>>, vector<3x64xf32>
    %cst_13 = arith.constant dense<0.000000e+00> : vector<32x64xf32>
    %12 = tpu.matmul %10, %11, %cst_13 {dimension_numbers = #tpu.dot_dimension_numbers<[1], [0], [0], [1], [0, 0, 1, 1], [], []>} : vector<32x3xf32>, vector<3x64xf32>, vector<32x64xf32> -> vector<32x64xf32>
    %13 = vector.extract_strided_slice %9 {offsets = [0, 0], sizes = [32, 32], strides = [1, 1]} : vector<32x96xf32> to vector<32x32xf32>
    %14 = tpu.concatenate %12, %13 in 1 : vector<32x64xf32>, vector<32x32xf32> -> vector<32x96xf32>
    %c0_14 = arith.constant 0 : index
    %c0_15 = arith.constant 0 : index
    %15 = vector.load %arg7[%c0_14, %c0_15] : memref<32x96xf32, #tpu.memory_space<vmem>>, vector<32x96xf32>
    tpu.vector_store %arg7[%c0_14, %c0_15], %14 {strides = array<i32>} : memref<32x96xf32, #tpu.memory_space<vmem>>, vector<32x96xf32>,
    %16 = vector.extract_strided_slice %9 {offsets = [0, 32], sizes = [32, 64], strides = [1, 1]} : vector<32x96xf32> to vector<32x64xf32>
    %17 = tpu.concatenate %12, %16 in 1 : vector<32x64xf32>, vector<32x64xf32> -> vector<32x128xf32>
    %c0_16 = arith.constant 0 : index
    %c0_17 = arith.constant 0 : index
    %18 = vector.load %arg8[%c0_16, %c0_17] : memref<32x128xf32, #tpu.memory_space<vmem>>, vector<32x128xf32>
    tpu.vector_store %arg8[%c0_16, %c0_17], %17 {strides = array<i32>} : memref<32x128xf32, #tpu.memory_space<vmem>>, vector<32x128xf32>,
    return
  }
  func.func @transform_0(%arg0: i32) -> (i32, i32) {
    %c0_i32 = arith.constant 0 : i32
    %c0_i32_0 = arith.constant 0 : i32
    return %arg0, %c0_i32 : i32, i32
  }
  func.func @transform_1(%arg0: i32) -> (i32, i32) {
    %c0_i32 = arith.constant 0 : i32
    %c0_i32_0 = arith.constant 0 : i32
    return %arg0, %c0_i32 : i32, i32
  }
  func.func @transform_2(%arg0: i32) -> (i32, i32) {
    %c0_i32 = arith.constant 0 : i32
    %c0_i32_0 = arith.constant 0 : i32
    %c0_i32_1 = arith.constant 0 : i32
    return %c0_i32, %c0_i32_0 : i32, i32
  }
  func.func @transform_3(%arg0: i32) -> (i32, i32) {
    %c0_i32 = arith.constant 0 : i32
    %c0_i32_0 = arith.constant 0 : i32
    %c0_i32_1 = arith.constant 0 : i32
    return %c0_i32, %c0_i32_0 : i32, i32
  }
  func.func @transform_4(%arg0: i32) -> (i32, i32) {
    %c0_i32 = arith.constant 0 : i32
    %c0_i32_0 = arith.constant 0 : i32
    %c0_i32_1 = arith.constant 0 : i32
    return %c0_i32, %c0_i32_0 : i32, i32
  }
  func.func @transform_5(%arg0: i32) -> (i32, i32) {
    %c0_i32 = arith.constant 0 : i32
    %c0_i32_0 = arith.constant 0 : i32
    %c0_i32_1 = arith.constant 0 : i32
    return %c0_i32, %c0_i32_0 : i32, i32
  }
  func.func @transform_6(%arg0: i32) -> (i32, i32) {
    %c0_i32 = arith.constant 0 : i32
    %c0_i32_0 = arith.constant 0 : i32
    return %arg0, %c0_i32 : i32, i32
  }
  func.func @transform_7(%arg0: i32) -> (i32, i32) {
    %c0_i32 = arith.constant 0 : i32
    %c0_i32_0 = arith.constant 0 : i32
    return %arg0, %c0_i32 : i32, i32
  }
}

</mosaic_0001>

<llo_original>
// kernel: tpu_custom_call.1
$region0: #{tpu_custom_call.1}
  #allocation0 [shape = 'u32[]', space=smem, size = 0x4, offset = 0x4, fixed_abs, tag = 'smem constant byte address 0x4 - core index']
  #allocation1 [shape = 'u32[72,128]{1,0:T(1,128)}', space=vmem, size = 0x9000, scoped, tag = 'internal scratch']
  %s0 = inlined_call_operand.vmem [shape: f32[64,8], index: 0, kind: input, shape index: {}]
  %s1 = inlined_call_operand.vmem [shape: f32[64,3], index: 1, kind: input, shape index: {}]
  %s2 = inlined_call_operand.vmem [shape: f32[8,8], index: 2, kind: input, shape index: {}]
  %s3 = inlined_call_operand.vmem [shape: f32[1,8], index: 3, kind: input, shape index: {}]
  %s4 = inlined_call_operand.vmem [shape: f32[8,96], index: 4, kind: input, shape index: {}]
  %s5 = inlined_call_operand.vmem [shape: f32[3,64], index: 5, kind: input, shape index: {}]
  %s6 = inlined_call_operand.hbm [shape: f32[64,96], index: 6, kind: output, shape index: {0}]
  %s7 = inlined_call_operand.hbm [shape: f32[64,128], index: 7, kind: output, shape index: {1}]
  %8 = xla_tuple %s6, %s7
  %s9 = sld [smem:[#allocation0]]
  $region65: #{tpu_custom_call.1} parent=0
    _
  %s11 = ssub.s32 1, %s9
  %s12 = scalar_select 0, %s11, %s9
  $region1: #{tpu_custom_call.1} parent=0
    #allocation2 [shape = 'u8[32768]{0}', space=vmem, size = 0x8000, scoped, tag = 'output window, operand 0']
    #allocation3 [shape = 's32[2]{0}', space=sflag, size = 0x8, scoped, tag = 'scoped memory for tpu_custom_call.1']
    #allocation4 [shape = 'u8[32768]{0}', space=vmem, size = 0x8000, scoped, tag = 'output window, operand 1']
    #allocation5 [shape = 's32[2]{0}', space=sflag, size = 0x8, scoped, tag = 'scoped memory for tpu_custom_call.1']
    %13 = vsyncpa [#allocation3], 0
    %s14 = scalar_lea.sflag [#allocation3], 1
    %15 = vsyncpa %s14, 0
    %16 = vsyncpa [#allocation5], 0
    %s17 = scalar_lea.sflag [#allocation5], 1
    %18 = vsyncpa %s17, 0
    loop: start=0, step=1, limit=4
    $region2: #{tpu_custom_call.1} parent=1 // loop_pre_header
      _
    $region3: #{tpu_custom_call.1} parent=1 // loop_header
      %s20 = sphi 0, %s24
      %p21 = scmp.ge.s32.totalorder %s20, 4
      %s30 = sphi 0, %s32
      %s33 = sphi 0, %s30
      %s34 = sphi 0, %s33
      %s50 = sphi 0, %s34
      %s56 = sphi 0, %s58
      %s59 = sphi 0, %s56
      %s60 = sphi 0, %s59
      %s76 = sphi 0, %s60
      %s80 = sphi 0, %s80
      %s82 = sphi 0, %s80
      %s83 = sphi 0, %s82
      %s97 = sphi 0, %s83
      %s101 = sphi 0, %s101
      %s103 = sphi 0, %s101
      %s104 = sphi 0, %s103
      %s118 = sphi 0, %s104
      %s122 = sphi 0, %s122
      %s124 = sphi 0, %s122
      %s125 = sphi 0, %s124
      %s139 = sphi 0, %s125
      %s143 = sphi 0, %s143
      %s145 = sphi 0, %s143
      %s146 = sphi 0, %s145
      %s160 = sphi 0, %s146
      %s166 = sphi 0, %s168
      %s169 = sphi 0, %s166
      %s170 = sphi 0, %s169
      %s186 = sphi 0, %s170
      %s192 = sphi 0, %s194
      %s195 = sphi 0, %s192
      %s196 = sphi 0, %s195
      %s212 = sphi 0, %s196
    $region4: #{tpu_custom_call.1} parent=1 // loop_header_branch
      %23 = sbr.rel (%p21) target = $region8
    $region5: #{tpu_custom_call.1} parent=1 // loop_body
      %s25 = ssub.s32 %s20, 1
      %s26 = ssub.s32 %s20, 2
      %s27 = sadd.s32 %s20, 1
      %s28 = ssub.s32 %s20, %s27
      %p29 = scmp.eq.s32.totalorder %s28, 0
      %s31 = sadd.s32 %s30, 1
      %s32 = scalar_select %p29, %s30, %s31
      %p35 = pneg %p29
      %p36 = scmp.eq.s32.totalorder %s20, 1
      %p37 = por %p35, %p36
      %p38 = scmp.ne.s32.totalorder %s30, %s33
      %p39 = scmp.eq.s32.totalorder %s20, 0
      %p40 = por %p38, %p39
      %p41 = scmp.ne.s32.totalorder %s30, %s33
      %p42 = scmp.eq.s32.totalorder %s25, 1
      %p43 = por %p41, %p42
      %p44 = scmp.ne.s32.totalorder %s33, %s34
      %p45 = scmp.eq.s32.totalorder %s25, 0
      %p46 = por %p44, %p45
      %p47 = scmp.ne.s32.totalorder %s33, %s34
      %p48 = scmp.eq.s32.totalorder %s26, 1
      %p49 = por %p47, %p48
      %p51 = scmp.ne.s32.totalorder %s34, %s50
      %p52 = scmp.eq.s32.totalorder %s26, 0
      %p53 = por %p51, %p52
      %s54 = ssub.s32 %s20, %s27
      %p55 = scmp.eq.s32.totalorder %s54, 0
      %s57 = sadd.s32 %s56, 1
      %s58 = scalar_select %p55, %s56, %s57
      %p61 = pneg %p55
      %p62 = scmp.eq.s32.totalorder %s20, 1
      %p63 = por %p61, %p62
      %p64 = scmp.ne.s32.totalorder %s56, %s59
      %p65 = scmp.eq.s32.totalorder %s20, 0
      %p66 = por %p64, %p65
      %p67 = scmp.ne.s32.totalorder %s56, %s59
      %p68 = scmp.eq.s32.totalorder %s25, 1
      %p69 = por %p67, %p68
      %p70 = scmp.ne.s32.totalorder %s59, %s60
      %p71 = scmp.eq.s32.totalorder %s25, 0
      %p72 = por %p70, %p71
      %p73 = scmp.ne.s32.totalorder %s59, %s60
      %p74 = scmp.eq.s32.totalorder %s26, 1
      %p75 = por %p73, %p74
      %p77 = scmp.ne.s32.totalorder %s60, %s76
      %p78 = scmp.eq.s32.totalorder %s26, 0
      %p79 = por %p77, %p78
      %s81 = sadd.s32 %s80, 1
      %p84 = scmp.eq.s32.totalorder %s20, 1
      %p85 = scmp.ne.s32.totalorder %s80, %s82
      %p86 = scmp.eq.s32.totalorder %s20, 0
      %p87 = por %p85, %p86
      %p88 = scmp.ne.s32.totalorder %s80, %s82
      %p89 = scmp.eq.s32.totalorder %s25, 1
      %p90 = por %p88, %p89
      %p91 = scmp.ne.s32.totalorder %s82, %s83
      %p92 = scmp.eq.s32.totalorder %s25, 0
      %p93 = por %p91, %p92
      %p94 = scmp.ne.s32.totalorder %s82, %s83
      %p95 = scmp.eq.s32.totalorder %s26, 1
      %p96 = por %p94, %p95
      %p98 = scmp.ne.s32.totalorder %s83, %s97
      %p99 = scmp.eq.s32.totalorder %s26, 0
      %p100 = por %p98, %p99
      %s102 = sadd.s32 %s101, 1
      %p105 = scmp.eq.s32.totalorder %s20, 1
      %p106 = scmp.ne.s32.totalorder %s101, %s103
      %p107 = scmp.eq.s32.totalorder %s20, 0
      %p108 = por %p106, %p107
      %p109 = scmp.ne.s32.totalorder %s101, %s103
      %p110 = scmp.eq.s32.totalorder %s25, 1
      %p111 = por %p109, %p110
      %p112 = scmp.ne.s32.totalorder %s103, %s104
      %p113 = scmp.eq.s32.totalorder %s25, 0
      %p114 = por %p112, %p113
      %p115 = scmp.ne.s32.totalorder %s103, %s104
      %p116 = scmp.eq.s32.totalorder %s26, 1
      %p117 = por %p115, %p116
      %p119 = scmp.ne.s32.totalorder %s104, %s118
      %p120 = scmp.eq.s32.totalorder %s26, 0
      %p121 = por %p119, %p120
      %s123 = sadd.s32 %s122, 1
      %p126 = scmp.eq.s32.totalorder %s20, 1
      %p127 = scmp.ne.s32.totalorder %s122, %s124
      %p128 = scmp.eq.s32.totalorder %s20, 0
      %p129 = por %p127, %p128
      %p130 = scmp.ne.s32.totalorder %s122, %s124
      %p131 = scmp.eq.s32.totalorder %s25, 1
      %p132 = por %p130, %p131
      %p133 = scmp.ne.s32.totalorder %s124, %s125
      %p134 = scmp.eq.s32.totalorder %s25, 0
      %p135 = por %p133, %p134
      %p136 = scmp.ne.s32.totalorder %s124, %s125
      %p137 = scmp.eq.s32.totalorder %s26, 1
      %p138 = por %p136, %p137
      %p140 = scmp.ne.s32.totalorder %s125, %s139
      %p141 = scmp.eq.s32.totalorder %s26, 0
      %p142 = por %p140, %p141
      %s144 = sadd.s32 %s143, 1
      %p147 = scmp.eq.s32.totalorder %s20, 1
      %p148 = scmp.ne.s32.totalorder %s143, %s145
      %p149 = scmp.eq.s32.totalorder %s20, 0
      %p150 = por %p148, %p149
      %p151 = scmp.ne.s32.totalorder %s143, %s145
      %p152 = scmp.eq.s32.totalorder %s25, 1
      %p153 = por %p151, %p152
      %p154 = scmp.ne.s32.totalorder %s145, %s146
      %p155 = scmp.eq.s32.totalorder %s25, 0
      %p156 = por %p154, %p155
      %p157 = scmp.ne.s32.totalorder %s145, %s146
      %p158 = scmp.eq.s32.totalorder %s26, 1
      %p159 = por %p157, %p158
      %p161 = scmp.ne.s32.totalorder %s146, %s160
      %p162 = scmp.eq.s32.totalorder %s26, 0
      %p163 = por %p161, %p162
      %s164 = ssub.s32 %s20, %s27
      %p165 = scmp.eq.s32.totalorder %s164, 0
      %s167 = sadd.s32 %s166, 1
      %s168 = scalar_select %p165, %s166, %s167
      %p171 = pneg %p165
      %p172 = scmp.eq.s32.totalorder %s20, 1
      %p173 = por %p171, %p172
      %p174 = scmp.ne.s32.totalorder %s166, %s169
      %p175 = scmp.eq.s32.totalorder %s20, 0
      %p176 = por %p174, %p175
      %p177 = scmp.ne.s32.totalorder %s166, %s169
      %p178 = scmp.eq.s32.totalorder %s25, 1
      %p179 = por %p177, %p178
      %p180 = scmp.ne.s32.totalorder %s169, %s170
      %p181 = scmp.eq.s32.totalorder %s25, 0
      %p182 = por %p180, %p181
      %p183 = scmp.ne.s32.totalorder %s169, %s170
      %p184 = scmp.eq.s32.totalorder %s26, 1
      %p185 = por %p183, %p184
      %p187 = scmp.ne.s32.totalorder %s170, %s186
      %p188 = scmp.eq.s32.totalorder %s26, 0
      %p189 = por %p187, %p188
      %s190 = ssub.s32 %s20, %s27
      %p191 = scmp.eq.s32.totalorder %s190, 0
      %s193 = sadd.s32 %s192, 1
      %s194 = scalar_select %p191, %s192, %s193
      %p197 = pneg %p191
      %p198 = scmp.eq.s32.totalorder %s20, 1
      %p199 = por %p197, %p198
      %p200 = scmp.ne.s32.totalorder %s192, %s195
      %p201 = scmp.eq.s32.totalorder %s20, 0
      %p202 = por %p200, %p201
      %p203 = scmp.ne.s32.totalorder %s192, %s195
      %p204 = scmp.eq.s32.totalorder %s25, 1
      %p205 = por %p203, %p204
      %p206 = scmp.ne.s32.totalorder %s195, %s196
      %p207 = scmp.eq.s32.totalorder %s25, 0
      %p208 = por %p206, %p207
      %p209 = scmp.ne.s32.totalorder %s195, %s196
      %p210 = scmp.eq.s32.totalorder %s26, 1
      %p211 = por %p209, %p210
      %p213 = scmp.ne.s32.totalorder %s196, %s212
      %p214 = scmp.eq.s32.totalorder %s26, 0
      %p215 = por %p213, %p214
      %p216 = scmp.le.s32.totalorder 1, %s20
      %p217 = scmp.lt.s32.totalorder %s20, 3
      %p218 = pnand %p216, %p217
      %p219 = pneg %p218
      // Predicated region
      $region9: #{tpu_custom_call.1} parent=5 // pred_check
        _
      $region10: #{tpu_custom_call.1} parent=5 // pred_check_branch
        %221 = sbr.rel (%p218) target = $region12
      $region11: #{tpu_custom_call.1} parent=5 // pred_region
        %s222 = ssub.s32 %s20, 1
        // Predicated region
        $region13: #{tpu_custom_call.1} parent=11 // pred_check
          %p223 = pneg %p93
        $region14: #{tpu_custom_call.1} parent=11 // pred_check_branch
          %225 = sbr.rel (%p223) target = $region16
        $region15: #{tpu_custom_call.1} parent=11 // pred_region
          _
        $region16: #{tpu_custom_call.1} parent=11 // pred_fallthru
          _
        // Predicated region
        $region17: #{tpu_custom_call.1} parent=11 // pred_check
          %p226 = pneg %p114
        $region18: #{tpu_custom_call.1} parent=11 // pred_check_branch
          %228 = sbr.rel (%p226) target = $region20
        $region19: #{tpu_custom_call.1} parent=11 // pred_region
          _
        $region20: #{tpu_custom_call.1} parent=11 // pred_fallthru
          _
        // Predicated region
        $region21: #{tpu_custom_call.1} parent=11 // pred_check
          %p229 = pneg %p135
        $region22: #{tpu_custom_call.1} parent=11 // pred_check_branch
          %231 = sbr.rel (%p229) target = $region24
        $region23: #{tpu_custom_call.1} parent=11 // pred_region
          _
        $region24: #{tpu_custom_call.1} parent=11 // pred_fallthru
          _
        // Predicated region
        $region25: #{tpu_custom_call.1} parent=11 // pred_check
          %p232 = pneg %p156
        $region26: #{tpu_custom_call.1} parent=11 // pred_check_branch
          %234 = sbr.rel (%p232) target = $region28
        $region27: #{tpu_custom_call.1} parent=11 // pred_region
          _
        $region28: #{tpu_custom_call.1} parent=11 // pred_fallthru
          _
      $region12: #{tpu_custom_call.1} parent=5 // pred_fallthru
        _
      %p235 = scmp.lt.s32.totalorder %s20, 2
      // Predicated region
      $region29: #{tpu_custom_call.1} parent=5 // pred_check
        %p236 = pneg %p235
      $region30: #{tpu_custom_call.1} parent=5 // pred_check_branch
        %238 = sbr.rel (%p236) target = $region32
      $region31: #{tpu_custom_call.1} parent=5 // pred_region
        // Predicated region
        $region33: #{tpu_custom_call.1} parent=31 // pred_check
          %p239 = pneg %p40
        $region34: #{tpu_custom_call.1} parent=31 // pred_check_branch
          %241 = sbr.rel (%p239) target = $region36
        $region35: #{tpu_custom_call.1} parent=31 // pred_region
          %s242 = smul.u32 4, %s20
          %p243 = scmp.lt.s32.totalorder %s242, 7
          %s244 = scalar_select %p243, %s242, 7
          %s245 = smul.addr %s244, 8
          %s246 = scalar_lea.vmem %s0, %s245
          %s247 = smul.u32 4, %s20
        $region36: #{tpu_custom_call.1} parent=31 // pred_fallthru
          _
        // Predicated region
        $region37: #{tpu_custom_call.1} parent=31 // pred_check
          %p248 = pneg %p66
        $region38: #{tpu_custom_call.1} parent=31 // pred_check_branch
          %250 = sbr.rel (%p248) target = $region40
        $region39: #{tpu_custom_call.1} parent=31 // pred_region
          %s251 = smul.u32 4, %s20
          %p252 = scmp.lt.s32.totalorder %s251, 7
          %s253 = scalar_select %p252, %s251, 7
          %s254 = smul.addr %s253, 8
          %s255 = scalar_lea.vmem %s1, %s254
          %s256 = smul.u32 4, %s20
        $region40: #{tpu_custom_call.1} parent=31 // pred_fallthru
          _
      $region32: #{tpu_custom_call.1} parent=5 // pred_fallthru
        _
      %p257 = scmp.le.s32.totalorder 1, %s20
      %p258 = scmp.lt.s32.totalorder %s20, 3
      %p259 = pnand %p257, %p258
      %p260 = pneg %p259
      // Predicated region
      $region41: #{tpu_custom_call.1} parent=5 // pred_check
        _
      $region42: #{tpu_custom_call.1} parent=5 // pred_check_branch
        %262 = sbr.rel (%p259) target = $region44
      $region43: #{tpu_custom_call.1} parent=5 // pred_region
        %s263 = ssub.s32 %s20, 1
        %s264 = smul.u32 4, %s25
        %p265 = scmp.lt.s32.totalorder %s264, 7
        %s266 = scalar_select %p265, %s264, 7
        %s267 = smul.addr %s266, 8
        %s268 = scalar_lea.vmem %s0, %s267
        %p269 = pneg %p46
        %p270 = pneg %p43
        %s271 = smul.u32 4, %s25
        %p272 = scmp.lt.s32.totalorder %s271, 7
        %s273 = scalar_select %p272, %s271, 7
        %s274 = smul.addr %s273, 8
        %s275 = scalar_lea.vmem %s1, %s274
        %p276 = pneg %p72
        %p277 = pneg %p69
        %p278 = pneg %p93
        %p279 = pneg %p90
        %p280 = pneg %p114
        %p281 = pneg %p111
        %p282 = pneg %p135
        %p283 = pneg %p132
        %p284 = pneg %p156
        %p285 = pneg %p153
        %p286 = pneg %p182
        %p287 = pneg %p179
        %s288 = sand.u32 %s169, 1
        %s289 = scalar_lea.sflag [#allocation3], %s288
        %s290 = sand.u32 %s169, 1
        %s291 = smul.addr %s290, 32
        %s292 = scalar_lea.vmem [#allocation2], %s291
        %p293 = pneg %p208
        %p294 = pneg %p205
        %s295 = sand.u32 %s195, 1
        %s296 = scalar_lea.sflag [#allocation5], %s295
        %s297 = sand.u32 %s195, 1
        %s298 = smul.addr %s297, 32
        %s299 = scalar_lea.vmem [#allocation4], %s298
        %s300 = smul.u32 4, %s25
        %p301 = scmp.lt.s32.totalorder %s300, 7
        %s302 = scalar_select %p301, %s300, 7
        %s303 = smul.addr %s302, 8
        %s304 = scalar_lea.vmem %s0, %s303
        %s305 = smul.u32 4, %s25
        %s306 = smul.u32 4, %s25
        %p307 = scmp.lt.s32.totalorder %s306, 7
        %s308 = scalar_select %p307, %s306, 7
        %s309 = smul.addr %s308, 8
        %s310 = scalar_lea.vmem %s1, %s309
        %s311 = smul.u32 4, %s25
        %s312 = smul.u32 4, %s25
        %s313 = smul.u32 4, %s25
        %v314 = vld [vmem:[%s304] sm:$0xff]
        %v315 = vld [vmem:[%s304 + $0x8] sm:$0xff]
        %v316 = vld [vmem:[%s304 + $0x10] sm:$0xff]
        %v317 = vld [vmem:[%s304 + $0x18] sm:$0xff]
        %v318 = vld [vmem:[%s2] sm:$0xff]
        %v319 = vld [vmem:[%s3] sm:$0x1]
        %v321 = vperm.slane %v319, 0
        %vm323 = vcmask 64512
        %v325 = vsel %vm323, %v314, 0
        %v328 = vsel %vm323, %v315, 0
        %v331 = vsel %vm323, %v316, 0
        %v334 = vsel %vm323, %v317, 0
        %336 = vmatpush.msra.mxu0 0.0
        %337 = vmatpush.msra.mxu0 0.0
        %338 = vmatpush.msra.mxu0 0.0
        %339 = vmatpush.msra.mxu0 0.0
        %340 = vmatpush.msra.mxu0 0.0
        %341 = vmatpush.msra.mxu0 0.0
        %342 = vmatpush.msra.mxu0 0.0
        %343 = vmatpush.msra.mxu0 0.0
        %344 = vmatpush.msra.mxu0 0.0
        %345 = vmatpush.msra.mxu0 0.0
        %346 = vmatpush.msra.mxu0 0.0
        %347 = vmatpush.msra.mxu0 0.0
        %348 = vmatpush.msra.mxu0 0.0
        %349 = vmatpush.msra.mxu0 0.0
        %350 = vmatpush.msra.mxu0 0.0
        %351 = vmatpush.msra.mxu0 %v318
        %352 = vmatmul.f32.gmra.mxu0 %v325
        %v353 = vpop.f32.mrf.mxu0
        %v354 = vadd.f32 %v321, %v353
        %355 = vmatmul.f32.gmra.mxu0 %v328
        %v356 = vpop.f32.mrf.mxu0
        %v357 = vadd.f32 %v321, %v356
        %358 = vmatmul.f32.gmra.mxu0 %v331
        %v359 = vpop.f32.mrf.mxu0
        %v360 = vadd.f32 %v321, %v359
        %361 = vmatmul.f32.gmra.mxu0 %v334
        %v362 = vpop.f32.mrf.mxu0
        %v363 = vadd.f32 %v321, %v362
        %364 = vdwg.mxu0
        %v365 = vmax.f32 %v354, 0.0
        %v366 = vmax.f32 %v357, 0.0
        %v367 = vmax.f32 %v360, 0.0
        %v368 = vmax.f32 %v363, 0.0
        %v369 = vld [vmem:[%s4] sm:$0xff]
        %v371 = vsel %vm323, %v365, 0
        %v374 = vsel %vm323, %v366, 0
        %v377 = vsel %vm323, %v367, 0
        %v380 = vsel %vm323, %v368, 0
        %382 = vmatpush.msra.mxu0 0.0
        %383 = vmatpush.msra.mxu0 0.0
        %384 = vmatpush.msra.mxu0 0.0
        %385 = vmatpush.msra.mxu0 0.0
        %386 = vmatpush.msra.mxu0 0.0
        %387 = vmatpush.msra.mxu0 0.0
        %388 = vmatpush.msra.mxu0 0.0
        %389 = vmatpush.msra.mxu0 0.0
        %390 = vmatpush.msra.mxu0 0.0
        %391 = vmatpush.msra.mxu0 0.0
        %392 = vmatpush.msra.mxu0 0.0
        %393 = vmatpush.msra.mxu0 0.0
        %394 = vmatpush.msra.mxu0 0.0
        %395 = vmatpush.msra.mxu0 0.0
        %396 = vmatpush.msra.mxu0 0.0
        %397 = vmatpush.msra.mxu0 %v369
        %398 = vmatmul.f32.gmra.mxu0 %v371
        %v399 = vpop.f32.mrf.mxu0
        %v400 = vadd.f32 0.0, %v399
        %401 = vmatmul.f32.gmra.mxu0 %v374
        %v402 = vpop.f32.mrf.mxu0
        %v403 = vadd.f32 0.0, %v402
        %404 = vmatmul.f32.gmra.mxu0 %v377
        %v405 = vpop.f32.mrf.mxu0
        %v406 = vadd.f32 0.0, %v405
        %407 = vmatmul.f32.gmra.mxu0 %v380
        %v408 = vpop.f32.mrf.mxu0
        %v409 = vadd.f32 0.0, %v408
        %410 = vdwg.mxu0
        %v411 = vld [vmem:[%s310] sm:$0xff]
        %v412 = vld [vmem:[%s310 + $0x8] sm:$0xff]
        %v413 = vld [vmem:[%s310 + $0x10] sm:$0xff]
        %v414 = vld [vmem:[%s310 + $0x18] sm:$0xff]
        %v415 = vld [vmem:[%s5] sm:$0x7]
        %vm416 = vcmask 23552
        %v418 = vsel %vm416, %v411, 0
        %v421 = vsel %vm416, %v412, 0
        %v424 = vsel %vm416, %v413, 0
        %v427 = vsel %vm416, %v414, 0
        %vm429 = vcmask 1042432
        %v431 = vsel %vm429, %v415, 0
        %433 = vmatpush.msra.mxu0 0.0
        %434 = vmatpush.msra.mxu0 0.0
        %435 = vmatpush.msra.mxu0 0.0
        %436 = vmatpush.msra.mxu0 0.0
        %437 = vmatpush.msra.mxu0 0.0
        %438 = vmatpush.msra.mxu0 0.0
        %439 = vmatpush.msra.mxu0 0.0
        %440 = vmatpush.msra.mxu0 0.0
        %441 = vmatpush.msra.mxu0 0.0
        %442 = vmatpush.msra.mxu0 0.0
        %443 = vmatpush.msra.mxu0 0.0
        %444 = vmatpush.msra.mxu0 0.0
        %445 = vmatpush.msra.mxu0 0.0
        %446 = vmatpush.msra.mxu0 0.0
        %447 = vmatpush.msra.mxu0 0.0
        %448 = vmatpush.msra.mxu0 %v431
        %449 = vmatmul.f32.gmra.mxu0 %v418
        %v450 = vpop.f32.mrf.mxu0
        %v451 = vadd.f32 0.0, %v450
        %452 = vmatmul.f32.gmra.mxu0 %v421
        %v453 = vpop.f32.mrf.mxu0
        %v454 = vadd.f32 0.0, %v453
        %455 = vmatmul.f32.gmra.mxu0 %v424
        %v456 = vpop.f32.mrf.mxu0
        %v457 = vadd.f32 0.0, %v456
        %458 = vmatmul.f32.gmra.mxu0 %v427
        %v459 = vpop.f32.mrf.mxu0
        %v460 = vadd.f32 0.0, %v459
        %461 = vdwg.mxu0
        %466 = vrot.lane.b32.xlu0 %v400, 64
        %v467 = vpop.permute.xlu0 %466
        %468 = vrot.lane.b32.xlu0 %v403, 64
        %v469 = vpop.permute.xlu0 %468
        %470 = vrot.lane.b32.xlu0 %v406, 64
        %v471 = vpop.permute.xlu0 %470
        %472 = vrot.lane.b32.xlu0 %v409, 64
        %v473 = vpop.permute.xlu0 %472
        %vm478 = vcmask 523264
        %v479 = vsel %vm478, %v451, %v467
        %v480 = vsel %vm478, %v454, %v469
        %v481 = vsel %vm478, %v457, %v471
        %v482 = vsel %vm478, %v460, %v473
        %vm483 = vcmask 785408
        %484 = vst.msk [vmem:[%s292] sm:$0xff] %vm483, %v479
        %485 = vst.msk [vmem:[%s292 + $0x8] sm:$0xff] %vm483, %v480
        %486 = vst.msk [vmem:[%s292 + $0x10] sm:$0xff] %vm483, %v481
        %487 = vst.msk [vmem:[%s292 + $0x18] sm:$0xff] %vm483, %v482
        %488 = vrot.lane.b32.xlu0 %v400, 32
        %v489 = vpop.permute.xlu0 %488
        %490 = vrot.lane.b32.xlu0 %v403, 32
        %v491 = vpop.permute.xlu0 %490
        %492 = vrot.lane.b32.xlu0 %v406, 32
        %v493 = vpop.permute.xlu0 %492
        %494 = vrot.lane.b32.xlu0 %v409, 32
        %v495 = vpop.permute.xlu0 %494
        %v500 = vsel %vm478, %v451, %v489
        %v501 = vsel %vm478, %v454, %v491
        %v502 = vsel %vm478, %v457, %v493
        %v503 = vsel %vm478, %v460, %v495
        %504 = vst [vmem:[%s299] sm:$0xff] %v500
        %505 = vst [vmem:[%s299 + $0x8] sm:$0xff] %v501
        %506 = vst [vmem:[%s299 + $0x10] sm:$0xff] %v502
        %507 = vst [vmem:[%s299 + $0x18] sm:$0xff] %v503
        %s508 = sand.u32 %s169, 1
        %s509 = scalar_lea.sflag [#allocation3], %s508
        %s510 = sand.u32 %s169, 1
        %s511 = smul.addr %s510, 32
        %s512 = scalar_lea.vmem [#allocation2], %s511
        %s513 = sand.u32 %s195, 1
        %s514 = scalar_lea.sflag [#allocation5], %s513
        %s515 = sand.u32 %s195, 1
        %s516 = smul.addr %s515, 32
        %s517 = scalar_lea.vmem [#allocation4], %s516
        // Predicated region
        $region45: #{tpu_custom_call.1} parent=43 // pred_check
          %p518 = pneg %p179
        $region46: #{tpu_custom_call.1} parent=43 // pred_check_branch
          %520 = sbr.rel (%p518) target = $region48
        $region47: #{tpu_custom_call.1} parent=43 // pred_region
          %s521 = smul.u32 4, %s25
          %523 = vsyncadd %s509, 0
          %s524 = smul.addr %s521, 8
          %s525 = scalar_lea.hbm %s6, %s524
          %s526 = sshll.u32 %s512, 4
          %s527 = int_to_ptr.vmem [resolvable:$true] %s526
          %s528 = sshll.u32 %s525, 4
          %s529 = int_to_ptr.hbm [resolvable:$true] %s528
          %534 = dma.vmem_to_hbm [thread:$0]  %s527, 512, %s529, %s509, 128, 128, 8
        $region48: #{tpu_custom_call.1} parent=43 // pred_fallthru
          _
        // Predicated region
        $region49: #{tpu_custom_call.1} parent=43 // pred_check
          %p535 = pneg %p205
        $region50: #{tpu_custom_call.1} parent=43 // pred_check_branch
          %537 = sbr.rel (%p535) target = $region52
        $region51: #{tpu_custom_call.1} parent=43 // pred_region
          %s538 = smul.u32 4, %s25
          %540 = vsyncadd %s514, 0
          %s541 = smul.addr %s538, 8
          %s542 = scalar_lea.hbm %s7, %s541
          %s543 = sshll.u32 %s517, 4
          %s544 = int_to_ptr.vmem [resolvable:$true] %s543
          %s545 = sshll.u32 %s542, 4
          %s546 = int_to_ptr.hbm [resolvable:$true] %s545
          %551 = dma.vmem_to_hbm [thread:$0]  %s544, 512, %s546, %s514, 128, 128, 8
        $region52: #{tpu_custom_call.1} parent=43 // pred_fallthru
          _
      $region44: #{tpu_custom_call.1} parent=5 // pred_fallthru
        _
      %p552 = scmp.le.s32.totalorder 2, %s20
      // Predicated region
      $region53: #{tpu_custom_call.1} parent=5 // pred_check
        %p553 = pneg %p552
      $region54: #{tpu_custom_call.1} parent=5 // pred_check_branch
        %555 = sbr.rel (%p553) target = $region56
      $region55: #{tpu_custom_call.1} parent=5 // pred_region
        %s556 = ssub.s32 %s20, 2
        // Predicated region
        $region57: #{tpu_custom_call.1} parent=55 // pred_check
          %p557 = pneg %p185
        $region58: #{tpu_custom_call.1} parent=55 // pred_check_branch
          %559 = sbr.rel (%p557) target = $region60
        $region59: #{tpu_custom_call.1} parent=55 // pred_region
          %s560 = sand.u32 %s170, 1
          %s561 = scalar_lea.sflag [#allocation3], %s560
          %s562 = sand.u32 %s170, 1
          %s563 = smul.addr %s562, 32
          %s564 = scalar_lea.vmem [#allocation2], %s563
          %566 = dma.done %s561, 512
        $region60: #{tpu_custom_call.1} parent=55 // pred_fallthru
          _
        // Predicated region
        $region61: #{tpu_custom_call.1} parent=55 // pred_check
          %p567 = pneg %p211
        $region62: #{tpu_custom_call.1} parent=55 // pred_check_branch
          %569 = sbr.rel (%p567) target = $region64
        $region63: #{tpu_custom_call.1} parent=55 // pred_region
          %s570 = sand.u32 %s196, 1
          %s571 = scalar_lea.sflag [#allocation5], %s570
          %s572 = sand.u32 %s196, 1
          %s573 = smul.addr %s572, 32
          %s574 = scalar_lea.vmem [#allocation4], %s573
          %576 = dma.done %s571, 512
        $region64: #{tpu_custom_call.1} parent=55 // pred_fallthru
          _
      $region56: #{tpu_custom_call.1} parent=5 // pred_fallthru
        _
    $region6: #{tpu_custom_call.1} parent=1 // loop_footer
      %s24 = sadd.s32 1, %s20
    $region7: #{tpu_custom_call.1} parent=1 // loop_footer_branch
      %19 = sbr.rel target = $region3
    $region8: #{tpu_custom_call.1} parent=1 // loop_exit
      _
    %577 = vsyncpa [#allocation3], 1
    %s578 = scalar_lea.sflag [#allocation3], 1
    %579 = vsyncpa %s578, 1
    %580 = vsyncpa [#allocation5], 1
    %s581 = scalar_lea.sflag [#allocation5], 1
    %582 = vsyncpa %s581, 1

</llo_original>
